<compile_context>
chip_gen: v5e
topology: v5e:2x2
jax: 0.10.0
libtpu: 0.0.40
codegen_flags: <defaults>
</compile_context>

<pallas_src>
import jax
import jax.numpy as jnp
import numpy as np
from jax.experimental import pallas as pl
from jax.experimental.pallas import tpu as pltpu

# Plain Python float (NOT a jnp/np device array) -> lowers as a literal.
NEG_INF = -1e20


def _round_up(x, m):
    return ((x + m - 1) // m) * m


def _tpu_vmem_bytes():
    """Physical VMEM of the attached TPU; conservative v7x-sized fallback."""
    try:
        return int(pltpu.get_tpu_info().vmem_capacity_bytes)
    except Exception:
        return 64 * 1024 * 1024


def _score_vmem_estimate(nb, K, H, KP, cdt_bytes):
    """Rough per-step VMEM bytes: layout-padded, double-buffered pipeline
    copies of every block plus in-kernel temporaries."""
    sub = max(8, 32 // cdt_bytes)            # sublane packing of compute dtype
    hp = _round_up(H, 128)
    h2p = _round_up(2 * H, 128)
    kp_sub = _round_up(K, sub)
    pool_blk = nb * kp_sub * hp * cdt_bytes
    ctx_blk = nb * h2p * cdt_bytes
    mask_blk = nb * KP * 4
    out_blk = nb * KP * 4
    wts = (H * h2p + H * hp) * cdt_bytes + 2 * hp * 4
    pipelined = 2 * (pool_blk + ctx_blk + mask_blk + wts + out_blk)
    temps = nb * kp_sub * hp * 4 + 4 * nb * hp * 4 + 2 * nb * KP * 4
    return pipelined + temps


_NB_CANDIDATES = (512, 384, 256, 192, 128, 96, 64, 48, 32, 16)


def _pick_block_rows(N, K, H, KP, cdt_bytes, budget):
    """Largest batch tile that fits the VMEM budget, keeps row-padding waste
    bounded, and leaves >= 2 grid steps (megacore / v7x) for non-tiny N."""
    n16 = _round_up(max(int(N), 1), 16)
    tiny = n16 <= 32
    for c in _NB_CANDIDATES:
        if c > n16:
            continue
        if _score_vmem_estimate(c, K, H, KP, cdt_bytes) > budget:
            continue
        n_pad = _round_up(n16, c)
        waste_ok = (c == 16) or ((n_pad - N) * 8 <= n_pad)
        multi_ok = tiny or (n_pad // c >= 2)
        if waste_ok and multi_ok:
            return c
    return 16


# ---------------------------------------------------------------------------
# Kernel 1: masked knowledge-tracking score (the hot path)
# ---------------------------------------------------------------------------
def _score_kernel(ctx_ref, wc_ref, bc_ref, wk_ref, bk_ref, pool_ref, mask_ref,
                  score_ref):
    # ctx_ref  : (Nb, 2H) compute dtype       wc_ref : (H, 2H)  [out, in]
    # bc_ref/bk_ref : (1, H) f32              wk_ref : (H, H)   [out, in]
    # pool_ref : (Nb, K, H) compute dtype     mask_ref : (Nb, KP) int32
    # score_ref: (Nb, KP) f32                 (KP = round_up(K, 128))
    f32 = jnp.float32

    # project_c: one MXU contraction over the 2H 'in' axis, f32 accumulation.
    c_pro = jax.lax.dot_general(
        ctx_ref[...], wc_ref[...], (((1,), (1,)), ((), ())),
        preferred_element_type=f32) + bc_ref[...].astype(f32)         # (Nb, H)

    # Algebraic fold of project_k:
    #   score[n,k] = <pool1[n,k,:] @ wk^T + bk, c_pro[n,:]>
    #              = <pool1[n,k,:], c_pro[n,:] @ wk> + <bk, c_pro[n,:]>
    v = jax.lax.dot_general(
        c_pro.astype(wk_ref.dtype), wk_ref[...], (((1,), (0,)), ((), ())),
        preferred_element_type=f32)                                   # (Nb, H)
    s = jnp.sum(c_pro * bk_ref[...].astype(f32), axis=-1,
                keepdims=True)                                        # (Nb, 1)

    # Score contraction stays on the VPU/XLU.  Multiply in the compute dtype
    # (no f32 copy of the pool block); accumulate the H-reduction in f32.
    prod = pool_ref[...] * v.astype(pool_ref.dtype)[:, None, :]       # (Nb,K,H)
    raw = jnp.sum(prod, axis=-1, dtype=f32) + s                       # (Nb, K)

    nb, kp = score_ref.shape
    k = raw.shape[1]
    if kp > k:
        # Widen K -> KP on the MXU with a tiny 0/1 selector (one nonzero per
        # output column -> exact copy).  Keeps the output store a single
        # full-width unmasked vst; padded columns get NEG_INF via the mask.
        row = jax.lax.broadcasted_iota(jnp.int32, (k, kp), 0)
        col = jax.lax.broadcasted_iota(jnp.int32, (k, kp), 1)
        proj = (row == col).astype(f32)                               # (K, KP)
        raw = jax.lax.dot_general(raw, proj, (((1,), (0,)), ((), ())),
                                  preferred_element_type=f32)         # (Nb,KP)

    # mask is pre-padded with zeros beyond K and beyond N.
    score_ref[...] = jnp.where(mask_ref[...] != 0, raw, NEG_INF)


def knowledge_tracking_score(ctx_xy, wc, bc, wk, bk, pool1, ck_mask,
                             compute_dtype=jnp.bfloat16, block_rows=None):
    """Masked tracking score [N, K] (float32).

    ctx_xy: [N, 2H] concatenated context rows; wc: [H, 2H]; wk: [H, H]
    (nn.Linear [out, in] layout).  block_rows=None -> auto-size from VMEM."""
    N, H2 = ctx_xy.shape
    H = H2 // 2
    K = pool1.shape[1]
    cdt = np.dtype(ctx_xy.dtype if compute_dtype is None else compute_dtype)

    kp = _round_up(K, 128)                    # lane-dense score block
    vmem_phys = _tpu_vmem_bytes()
    if block_rows is None:
        nb = _pick_block_rows(N, K, H, kp, cdt.itemsize,
                              budget=int(0.45 * vmem_phys))
    else:
        nb = max(16, min(_round_up(int(block_rows), 16),
                         _round_up(max(N, 1), 16)))
    n_pad = _round_up(max(N, 1), nb)
    grid = (n_pad // nb,)

    def cast(x):
        return x if x.dtype == cdt else x.astype(cdt)

    ctx_p = jnp.pad(cast(ctx_xy), ((0, n_pad - N), (0, 0)))
    pool_p = jnp.pad(cast(pool1), ((0, n_pad - N), (0, 0), (0, 0)))
    mask_p = jnp.pad(ck_mask.astype(jnp.int32),
                     ((0, n_pad - N), (0, kp - K)))

    wc_c = cast(wc)                           # (H, 2H), [out, in], untransposed
    wk_c = cast(wk)                           # (H, H)
    bc2 = bc.reshape(1, H).astype(jnp.float32)
    bk2 = bk.reshape(1, H).astype(jnp.float32)

    est = _score_vmem_estimate(nb, K, H, kp, cdt.itemsize)
    vmem_limit = int(min(int(0.85 * vmem_phys), max(32 * 2**20, 2 * est)))

    isz = cdt.itemsize
    flops = int(n_pad * (2 * (2 * H) * H + 2 * H * H + 2 * K * H + 2 * H)
                + (n_pad * 2 * K * kp if kp > K else 0))
    bytes_accessed = int(
        (n_pad * 2 * H + n_pad * K * H + 3 * H * H) * isz    # ctx, pool, weights
        + 2 * H * 4                                          # biases
        + n_pad * kp * 4                                     # mask
        + n_pad * kp * 4)                                    # score out
    cost = pl.CostEstimate(flops=flops, transcendentals=0,
                           bytes_accessed=bytes_accessed)

    score_padded = pl.pallas_call(
        _score_kernel,
        out_shape=jax.ShapeDtypeStruct((n_pad, kp), jnp.float32),
        grid=grid,
        in_specs=[
            pl.BlockSpec((nb, 2 * H), lambda n: (n, 0)),     # ctx rows
            pl.BlockSpec((H, 2 * H), lambda n: (0, 0)),      # wc
            pl.BlockSpec((1, H), lambda n: (0, 0)),          # bc
            pl.BlockSpec((H, H), lambda n: (0, 0)),          # wk
            pl.BlockSpec((1, H), lambda n: (0, 0)),          # bk
            pl.BlockSpec((nb, K, H), lambda n: (n, 0, 0)),   # pool1 rows
            pl.BlockSpec((nb, kp), lambda n: (n, 0)),        # padded ck mask
        ],
        out_specs=pl.BlockSpec((nb, kp), lambda n: (n, 0)),
        compiler_params=pltpu.CompilerParams(
            dimension_semantics=("parallel",),
            vmem_limit_bytes=vmem_limit),
        cost_estimate=cost,
    )(ctx_p, wc_c, bc2, wk_c, bk2, pool_p, mask_p)

    return score_padded[:N, :K]


# ---------------------------------------------------------------------------
# Kernel 2: fused gather of the selected [T,H] block and [H] row per batch
# ---------------------------------------------------------------------------
def _gather_rows_kernel(ids_ref, pool0_ref, pool1_ref, enc_ref, use_ref):
    # pool0_ref: (1,1,T,H), pool1_ref: (1,1,1,H); the K index is selected by
    # the scalar-prefetched ids inside the index_map.
    enc_ref[...] = pool0_ref[0]
    use_ref[...] = pool1_ref[0]


def gather_tracked_knowledge(pool0, pool1, ids):
    """pool0: [N,K,T,H], pool1: [N,K,H], ids: [N] int ->
       (pool0[n, ids[n]] : [N,T,H],  pool1[n, ids[n]] : [N,H])."""
    N, K, T, H = pool0.shape
    ids = jnp.clip(ids.astype(jnp.int32), 0, K - 1)  # no OOB DMA on bad labels
    pool1_r = pool1.reshape(N, K, 1, H)

    grid_spec = pltpu.PrefetchScalarGridSpec(
        num_scalar_prefetch=1,
        grid=(N,),
        in_specs=[
            pl.BlockSpec((1, 1, T, H), lambda n, ids_ref: (n, ids_ref[n], 0, 0)),
            pl.BlockSpec((1, 1, 1, H), lambda n, ids_ref: (n, ids_ref[n], 0, 0)),
        ],
        out_specs=[
            pl.BlockSpec((1, T, H), lambda n, ids_ref: (n, 0, 0)),
            pl.BlockSpec((1, 1, H), lambda n, ids_ref: (n, 0, 0)),
        ],
    )
    enc, use = pl.pallas_call(
        _gather_rows_kernel,
        out_shape=(jax.ShapeDtypeStruct((N, T, H), pool0.dtype),
                   jax.ShapeDtypeStruct((N, 1, H), pool1.dtype)),
        grid_spec=grid_spec,
        compiler_params=pltpu.CompilerParams(
            dimension_semantics=("parallel",)),   # rows independent -> v7x 2 TC
    )(ids, pool0, pool1_r)
    return enc, use.reshape(N, H)


# ---------------------------------------------------------------------------
# Full forward (matches PriorKnowldgeTracker.forward)
# ---------------------------------------------------------------------------
def prior_knowledge_tracker_forward(params,
                                    contexts_encoded,
                                    knowledge_tracking_pool_encoded,
                                    knowledge_tracking_pool_mask,
                                    tracking_ck_mask,
                                    knowledge_tracking_label,
                                    mode="train",
                                    compute_dtype=jnp.bfloat16,
                                    block_rows=None):
    wc, bc, wk, bk = params["wc"], params["bc"], params["wk"], params["bk"]

    ctx1 = contexts_encoded[1]                  # [N, C, H] (rows 0, 1 used)
    ctx_xy = jnp.concatenate([ctx1[:, 0, :], ctx1[:, 1, :]], axis=1)  # [N, 2H]

    pool0 = knowledge_tracking_pool_encoded[0]  # [N, K, T, H]
    pool1 = knowledge_tracking_pool_encoded[1]  # [N, K, H]
    N = pool0.shape[0]

    score = knowledge_tracking_score(ctx_xy, wc, bc, wk, bk, pool1,
                                     tracking_ck_mask,
                                     compute_dtype=compute_dtype,
                                     block_rows=block_rows)

    if mode == "inference":
        knowledge_tracking_ids = jnp.argmax(score, axis=1).astype(jnp.int32)
    else:  # "train"
        knowledge_tracking_ids = knowledge_tracking_label.astype(jnp.int32)

    # Fused Pallas gather of the selected [T,H] block and [H] row.
    tracked_knowledge_encoded, tracked_knowledge_use = gather_tracked_knowledge(
        pool0, pool1, knowledge_tracking_ids)

    # Tiny [T] bool mask row gather stays as XLA glue (converting the whole
    # bool pool to an int dtype for Pallas would cost more than it saves).
    batch_idx = jnp.arange(N)
    tracked_knowledge_mask = knowledge_tracking_pool_mask[
        batch_idx, knowledge_tracking_ids]                            # [N, T]

    return (score, tracked_knowledge_encoded, tracked_knowledge_mask,
            tracked_knowledge_use)


if __name__ == "__main__":
    N, C, H, K, T = 2, 2, 32, 8, 8

    key = jax.random.PRNGKey(0)
    ks = jax.random.split(key, 10)

    # Inputs
    ctx0 = jax.random.normal(ks[0], (N, C, T, H), jnp.float32)   # unused by module
    ctx1 = jax.random.normal(ks[1], (N, C, H), jnp.float32)
    pool0 = jax.random.normal(ks[2], (N, K, T, H), jnp.float32)
    pool1 = jax.random.normal(ks[3], (N, K, H), jnp.float32)
    pool_mask = jax.random.bernoulli(ks[4], 0.8, (N, K, T))
    tracking_ck_mask = jnp.concatenate(
        [jnp.ones((N, K - 2), bool), jnp.zeros((N, 2), bool)], axis=1)
    label = jnp.array([1, 3], dtype=jnp.int32)

    # Parameters (nn.Linear weight layout: [out, in])
    wc = jax.random.normal(ks[5], (H, 2 * H), jnp.float32) * 0.05
    bc = jax.random.normal(ks[6], (H,), jnp.float32) * 0.05
    wk = jax.random.normal(ks[7], (H, H), jnp.float32) * 0.05
    bk = jax.random.normal(ks[8], (H,), jnp.float32) * 0.05
    params = dict(wc=wc, bc=bc, wk=wk, bk=bk)

    # Default (bf16 compute) forward, train mode.
    outs = prior_knowledge_tracker_forward(
        params, (ctx0, ctx1), (pool0, pool1), pool_mask,
        tracking_ck_mask, label, mode="train")
    outs = jax.block_until_ready(outs)
    score, tracked_enc, tracked_mask, tracked_use = outs

    # Float64 numpy reference of the torch forward (optionally with the same
    # bf16 input quantization the kernel uses).
    def np_reference(cast_dtype):
        def cvt(a):
            a = jnp.asarray(a)
            if cast_dtype is not None:
                a = a.astype(cast_dtype)
            return np.asarray(a.astype(jnp.float32), dtype=np.float64)
        c1, p1, W_c, W_k = cvt(ctx1), cvt(pool1), cvt(wc), cvt(wk)
        b_c = np.asarray(bc, dtype=np.float64)
        b_k = np.asarray(bk, dtype=np.float64)
        cxy = np.concatenate([c1[:, 0, :], c1[:, 1, :]], axis=1)
        c_pro = cxy @ W_c.T + b_c
        k_pro = p1 @ W_k.T + b_k
        sc = np.einsum("nkh,nh->nk", k_pro, c_pro)
        return np.where(np.asarray(tracking_ck_mask), sc, NEG_INF)

    bi = np.arange(N)
    lbl = np.asarray(label)

    assert score.shape == (N, K)
    assert tracked_enc.shape == (N, T, H)
    assert tracked_mask.shape == (N, T)
    assert tracked_use.shape == (N, H)

    # bf16 path: compare against the reference on bf16-quantized inputs.
    assert np.allclose(np.asarray(score, dtype=np.float64),
                       np_reference(jnp.bfloat16), atol=2e-2, rtol=2e-2)

    # f32 path (compute_dtype=None) validates the algebraic fold.
    outs_f32 = prior_knowledge_tracker_forward(
        params, (ctx0, ctx1), (pool0, pool1), pool_mask,
        tracking_ck_mask, label, mode="train", compute_dtype=None)
    score_f32 = np.asarray(jax.block_until_ready(outs_f32)[0], dtype=np.float64)
    assert np.allclose(score_f32, np_reference(None), atol=2e-2, rtol=2e-2)

    # Gathered outputs are exact copies of the labeled rows.
    assert np.allclose(np.asarray(tracked_enc), np.asarray(pool0)[bi, lbl])
    assert np.array_equal(np.asarray(tracked_mask), np.asarray(pool_mask)[bi, lbl])
    assert np.allclose(np.asarray(tracked_use), np.asarray(pool1)[bi, lbl])

    # Inference mode (argmax path) also runs and gathers consistently.
    outs_inf = prior_knowledge_tracker_forward(
        params, (ctx0, ctx1), (pool0, pool1), pool_mask,
        tracking_ck_mask, label, mode="inference")
    score_i, enc_i, mask_i, use_i = jax.block_until_ready(outs_inf)
    ids_i = np.argmax(np.asarray(score_i), axis=1)
    assert np.allclose(np.asarray(use_i), np.asarray(pool1)[bi, ids_i])
    assert np.allclose(np.asarray(enc_i), np.asarray(pool0)[bi, ids_i])

    print("KERNEL_OK")
</pallas_src>

<mosaic_0001>
module attributes {stable_mosaic.version = 11 : i64} {
  func.func @_score_kernel(%arg0: i32, %arg1: memref<16x64xbf16, #tpu.memory_space<vmem>>, %arg2: memref<32x64xbf16, #tpu.memory_space<vmem>>, %arg3: memref<1x32xf32, #tpu.memory_space<vmem>>, %arg4: memref<32x32xbf16, #tpu.memory_space<vmem>>, %arg5: memref<1x32xf32, #tpu.memory_space<vmem>>, %arg6: memref<16x8x32xbf16, #tpu.memory_space<vmem>>, %arg7: memref<16x128xi32, #tpu.memory_space<vmem>>, %arg8: memref<16x128xf32, #tpu.memory_space<vmem>>) attributes {dimension_semantics = [#tpu.dimension_semantics<parallel>], iteration_bounds = array<i64: 1>, scalar_prefetch = 0 : i64, scratch_operands = 0 : i64, tpu.core_type = #tpu.core_type<tc>, window_params = [{transform_indices = @transform_0, window_bounds = array<i64: 16, 64>}, {pipeline_mode = #tpu.pipeline_mode<synchronous>, transform_indices = @transform_1, window_bounds = array<i64: 32, 64>}, {pipeline_mode = #tpu.pipeline_mode<synchronous>, transform_indices = @transform_2, window_bounds = array<i64: 1, 32>}, {pipeline_mode = #tpu.pipeline_mode<synchronous>, transform_indices = @transform_3, window_bounds = array<i64: 32, 32>}, {pipeline_mode = #tpu.pipeline_mode<synchronous>, transform_indices = @transform_4, window_bounds = array<i64: 1, 32>}, {transform_indices = @transform_5, window_bounds = array<i64: 16, 8, 32>}, {transform_indices = @transform_6, window_bounds = array<i64: 16, 128>}, {transform_indices = @transform_7, window_bounds = array<i64: 16, 128>}]} {
    %c0 = arith.constant 0 : index
    %c0_0 = arith.constant 0 : index
    %0 = vector.load %arg1[%c0, %c0_0] : memref<16x64xbf16, #tpu.memory_space<vmem>>, vector<16x64xbf16>
    %c0_1 = arith.constant 0 : index
    %c0_2 = arith.constant 0 : index
    %1 = vector.load %arg2[%c0_1, %c0_2] : memref<32x64xbf16, #tpu.memory_space<vmem>>, vector<32x64xbf16>
    %cst = arith.constant dense<0.000000e+00> : vector<16x32xf32>
    %2 = tpu.matmul %0, %1, %cst {dimension_numbers = #tpu.dot_dimension_numbers<[1], [1], [0], [0], [0, 0, 1, 0], [], []>} : vector<16x64xbf16>, vector<32x64xbf16>, vector<16x32xf32> -> vector<16x32xf32>
    %c0_3 = arith.constant 0 : index
    %c0_4 = arith.constant 0 : index
    %3 = vector.load %arg3[%c0_3, %c0_4] : memref<1x32xf32, #tpu.memory_space<vmem>>, vector<1x32xf32>
    %4 = vector.broadcast %3 : vector<1x32xf32> to vector<16x32xf32>
    %5 = arith.addf %2, %4 : vector<16x32xf32>
    %6 = arith.truncf %5 : vector<16x32xf32> to vector<16x32xbf16>
    %c0_5 = arith.constant 0 : index
    %c0_6 = arith.constant 0 : index
    %7 = vector.load %arg4[%c0_5, %c0_6] : memref<32x32xbf16, #tpu.memory_space<vmem>>, vector<32x32xbf16>
    %cst_7 = arith.constant dense<0.000000e+00> : vector<16x32xf32>
    %8 = tpu.matmul %6, %7, %cst_7 {dimension_numbers = #tpu.dot_dimension_numbers<[1], [0], [0], [1], [0, 0, 1, 1], [], []>} : vector<16x32xbf16>, vector<32x32xbf16>, vector<16x32xf32> -> vector<16x32xf32>
    %c0_8 = arith.constant 0 : index
    %c0_9 = arith.constant 0 : index
    %9 = vector.load %arg5[%c0_8, %c0_9] : memref<1x32xf32, #tpu.memory_space<vmem>>, vector<1x32xf32>
    %10 = vector.broadcast %9 : vector<1x32xf32> to vector<16x32xf32>
    %11 = arith.mulf %5, %10 : vector<16x32xf32>
    %cst_10 = arith.constant dense<0.000000e+00> : vector<16xf32>
    %12 = vector.multi_reduction <add>, %11, %cst_10 [1] : vector<16x32xf32> to vector<16xf32>
    %13 = vector.shape_cast %12 : vector<16xf32> to vector<16x1xf32>
    %c0_11 = arith.constant 0 : index
    %c0_12 = arith.constant 0 : index
    %c0_13 = arith.constant 0 : index
    %14 = vector.load %arg6[%c0_11, %c0_12, %c0_13] : memref<16x8x32xbf16, #tpu.memory_space<vmem>>, vector<16x8x32xbf16>
    %15 = arith.truncf %8 : vector<16x32xf32> to vector<16x32xbf16>
    %16 = vector.shape_cast %15 : vector<16x32xbf16> to vector<16x1x32xbf16>
    %17 = vector.broadcast %16 : vector<16x1x32xbf16> to vector<16x8x32xbf16>
    %18 = arith.mulf %14, %17 : vector<16x8x32xbf16>
    %19 = arith.extf %18 : vector<16x8x32xbf16> to vector<16x8x32xf32>
    %cst_14 = arith.constant dense<0.000000e+00> : vector<16x8xf32>
    %20 = vector.multi_reduction <add>, %19, %cst_14 [2] : vector<16x8x32xf32> to vector<16x8xf32>
    %21 = vector.broadcast %13 : vector<16x1xf32> to vector<16x8xf32>
    %22 = arith.addf %20, %21 : vector<16x8xf32>
    %23 = tpu.iota {dimensions = array<i32: 0>} : vector<8x128xi32>
    %24 = tpu.iota {dimensions = array<i32: 1>} : vector<8x128xi32>
    %25 = arith.cmpi eq, %23, %24 : vector<8x128xi32>
    %26 = arith.extui %25 : vector<8x128xi1> to vector<8x128xi32>
    %27 = arith.sitofp %26 : vector<8x128xi32> to vector<8x128xf32>
    %cst_15 = arith.constant dense<0.000000e+00> : vector<16x128xf32>
    %28 = tpu.matmul %22, %27, %cst_15 {dimension_numbers = #tpu.dot_dimension_numbers<[1], [0], [0], [1], [0, 0, 1, 1], [], []>} : vector<16x8xf32>, vector<8x128xf32>, vector<16x128xf32> -> vector<16x128xf32>
    %c0_16 = arith.constant 0 : index
    %c0_17 = arith.constant 0 : index
    %29 = vector.load %arg7[%c0_16, %c0_17] : memref<16x128xi32, #tpu.memory_space<vmem>>, vector<16x128xi32>
    %c0_i32 = arith.constant 0 : i32
    %30 = vector.broadcast %c0_i32 : i32 to vector<16x128xi32>
    %31 = arith.cmpi ne, %29, %30 : vector<16x128xi32>
    %cst_18 = arith.constant -1.000000e+20 : f32
    %32 = vector.broadcast %cst_18 : f32 to vector<16x128xf32>
    %33 = arith.select %31, %28, %32 : vector<16x128xi1>, vector<16x128xf32>
    %c0_19 = arith.constant 0 : index
    %c0_20 = arith.constant 0 : index
    %34 = vector.load %arg8[%c0_19, %c0_20] : memref<16x128xf32, #tpu.memory_space<vmem>>, vector<16x128xf32>
    tpu.vector_store %arg8[%c0_19, %c0_20], %33 {strides = array<i32>} : memref<16x128xf32, #tpu.memory_space<vmem>>, vector<16x128xf32>,
    return
  }
  func.func @transform_0(%arg0: i32) -> (i32, i32) {
    %c0_i32 = arith.constant 0 : i32
    %c0_i32_0 = arith.constant 0 : i32
    return %arg0, %c0_i32 : i32, i32
  }
  func.func @transform_1(%arg0: i32) -> (i32, i32) {
    %c0_i32 = arith.constant 0 : i32
    %c0_i32_0 = arith.constant 0 : i32
    %c0_i32_1 = arith.constant 0 : i32
    return %c0_i32, %c0_i32_0 : i32, i32
  }
  func.func @transform_2(%arg0: i32) -> (i32, i32) {
    %c0_i32 = arith.constant 0 : i32
    %c0_i32_0 = arith.constant 0 : i32
    %c0_i32_1 = arith.constant 0 : i32
    return %c0_i32, %c0_i32_0 : i32, i32
  }
  func.func @transform_3(%arg0: i32) -> (i32, i32) {
    %c0_i32 = arith.constant 0 : i32
    %c0_i32_0 = arith.constant 0 : i32
    %c0_i32_1 = arith.constant 0 : i32
    return %c0_i32, %c0_i32_0 : i32, i32
  }
  func.func @transform_4(%arg0: i32) -> (i32, i32) {
    %c0_i32 = arith.constant 0 : i32
    %c0_i32_0 = arith.constant 0 : i32
    %c0_i32_1 = arith.constant 0 : i32
    return %c0_i32, %c0_i32_0 : i32, i32
  }
  func.func @transform_5(%arg0: i32) -> (i32, i32, i32) {
    %c0_i32 = arith.constant 0 : i32
    %c0_i32_0 = arith.constant 0 : i32
    %c0_i32_1 = arith.constant 0 : i32
    return %arg0, %c0_i32, %c0_i32_0 : i32, i32, i32
  }
  func.func @transform_6(%arg0: i32) -> (i32, i32) {
    %c0_i32 = arith.constant 0 : i32
    %c0_i32_0 = arith.constant 0 : i32
    return %arg0, %c0_i32 : i32, i32
  }
  func.func @transform_7(%arg0: i32) -> (i32, i32) {
    %c0_i32 = arith.constant 0 : i32
    %c0_i32_0 = arith.constant 0 : i32
    return %arg0, %c0_i32 : i32, i32
  }
}

</mosaic_0001>

<llo_original>
// kernel: tpu_custom_call.1
$region0: #{tpu_custom_call.1}
  #allocation0 [shape = 'u32[]', space=smem, size = 0x4, offset = 0x4, fixed_abs, tag = 'smem constant byte address 0x4 - core index']
  #allocation1 [shape = 'u32[72,128]{1,0:T(1,128)}', space=vmem, size = 0x9000, scoped, tag = 'internal scratch']
  %s0 = inlined_call_operand.hbm [shape: bf16[16,64], index: 0, kind: input, shape index: {}]
  %s1 = inlined_call_operand.hbm [shape: bf16[32,64], index: 1, kind: input, shape index: {}]
  %s2 = inlined_call_operand.vmem [shape: f32[1,32], index: 2, kind: input, shape index: {}]
  %s3 = inlined_call_operand.hbm [shape: bf16[32,32], index: 3, kind: input, shape index: {}]
  %s4 = inlined_call_operand.vmem [shape: f32[1,32], index: 4, kind: input, shape index: {}]
  %s5 = inlined_call_operand.hbm [shape: bf16[16,8,32], index: 5, kind: input, shape index: {}]
  %s6 = inlined_call_operand.hbm [shape: s32[16,128], index: 6, kind: input, shape index: {}]
  %s7 = inlined_call_operand.hbm [shape: f32[16,128], index: 7, kind: output, shape index: {}]
  %s8 = sld [smem:[#allocation0]]
  $region58: #{tpu_custom_call.1} parent=0
    _
  %s10 = ssub.s32 1, %s8
  %s11 = scalar_select 0, %s10, %s8
  $region1: #{tpu_custom_call.1} parent=0
    #allocation2 [shape = 'u8[4096]{0}', space=vmem, size = 0x1000, scoped, tag = 'input window, operand 0, single buffered']
    #allocation3 [shape = 's32[1]{0}', space=sflag, size = 0x4, scoped, tag = 'scoped memory for tpu_custom_call.1']
    #allocation4 [shape = 's32[1]{0}', space=sflag, size = 0x4, scoped, tag = 'scoped memory for tpu_custom_call.1']
    #allocation5 [shape = 'u8[8192]{0}', space=vmem, size = 0x2000, scoped, tag = 'input window, operand 1, single buffered']
    #allocation6 [shape = 's32[1]{0}', space=sflag, size = 0x4, scoped, tag = 'scoped memory for tpu_custom_call.1']
    #allocation7 [shape = 'u8[8192]{0}', space=vmem, size = 0x2000, scoped, tag = 'input window, operand 3, single buffered']
    #allocation8 [shape = 'u8[32768]{0}', space=vmem, size = 0x8000, scoped, tag = 'input window, operand 5, single buffered']
    #allocation9 [shape = 's32[1]{0}', space=sflag, size = 0x4, scoped, tag = 'scoped memory for tpu_custom_call.1']
    #allocation10 [shape = 'u8[8192]{0}', space=vmem, size = 0x2000, scoped, tag = 'input window, operand 6, single buffered']
    #allocation11 [shape = 'u8[8192]{0}', space=vmem, size = 0x2000, scoped, tag = 'output window, operand 0, single buffered']
    %12 = vsyncpa [#allocation3], 0
    %13 = vsyncpa [#allocation6], 0
    %14 = vsyncpa [#allocation9], 0
    %15 = vsyncpa [#allocation4], 0
    // Predicated region
    $region2: #{tpu_custom_call.1} parent=1 // pred_check
      _
    $region3: #{tpu_custom_call.1} parent=1 // pred_check_branch
      %17 = sbr.rel (0) target = $region5
    $region4: #{tpu_custom_call.1} parent=1 // pred_region
      %19 = vsyncadd [#allocation3], 0
      %s20 = sshll.u32 %s0, 4
      %s21 = int_to_ptr.hbm [resolvable:$true] %s20
      %s22 = sshll.u32 [#allocation2], 4
      %s23 = int_to_ptr.vmem [resolvable:$true] %s22
      %28 = dma.hbm_to_vmem [thread:$0]  %s21, 128, %s23, [#allocation3], 64, 64, 4
    $region5: #{tpu_custom_call.1} parent=1 // pred_fallthru
      _
    // Predicated region
    $region6: #{tpu_custom_call.1} parent=1 // pred_check
      _
    $region7: #{tpu_custom_call.1} parent=1 // pred_check_branch
      %30 = sbr.rel (0) target = $region9
    $region8: #{tpu_custom_call.1} parent=1 // pred_region
      %32 = vsyncadd [#allocation6], 0
      %s33 = sshll.u32 %s1, 4
      %s34 = int_to_ptr.hbm [resolvable:$true] %s33
      %s35 = sshll.u32 [#allocation5], 4
      %s36 = int_to_ptr.vmem [resolvable:$true] %s35
      %41 = dma.hbm_to_vmem [thread:$0]  %s34, 256, %s36, [#allocation6], 64, 64, 4
    $region9: #{tpu_custom_call.1} parent=1 // pred_fallthru
      _
    // Predicated region
    $region10: #{tpu_custom_call.1} parent=1 // pred_check
      _
    $region11: #{tpu_custom_call.1} parent=1 // pred_check_branch
      %43 = sbr.rel (0) target = $region13
    $region12: #{tpu_custom_call.1} parent=1 // pred_region
      _
    $region13: #{tpu_custom_call.1} parent=1 // pred_fallthru
      _
    // Predicated region
    $region14: #{tpu_custom_call.1} parent=1 // pred_check
      _
    $region15: #{tpu_custom_call.1} parent=1 // pred_check_branch
      %45 = sbr.rel (0) target = $region17
    $region16: #{tpu_custom_call.1} parent=1 // pred_region
      %47 = vsyncadd [#allocation6], 0
      %s48 = sshll.u32 %s3, 4
      %s49 = int_to_ptr.hbm [resolvable:$true] %s48
      %s50 = sshll.u32 [#allocation7], 4
      %s51 = int_to_ptr.vmem [resolvable:$true] %s50
      %56 = dma.hbm_to_vmem [thread:$0]  %s49, 256, %s51, [#allocation6], 64, 64, 4
    $region17: #{tpu_custom_call.1} parent=1 // pred_fallthru
      _
    // Predicated region
    $region18: #{tpu_custom_call.1} parent=1 // pred_check
      _
    $region19: #{tpu_custom_call.1} parent=1 // pred_check_branch
      %58 = sbr.rel (0) target = $region21
    $region20: #{tpu_custom_call.1} parent=1 // pred_region
      _
    $region21: #{tpu_custom_call.1} parent=1 // pred_fallthru
      _
    // Predicated region
    $region22: #{tpu_custom_call.1} parent=1 // pred_check
      _
    $region23: #{tpu_custom_call.1} parent=1 // pred_check_branch
      %60 = sbr.rel (0) target = $region25
    $region24: #{tpu_custom_call.1} parent=1 // pred_region
      %62 = vsyncadd [#allocation9], 0
      %s63 = sshll.u32 %s5, 4
      %s64 = int_to_ptr.hbm [resolvable:$true] %s63
      %s65 = sshll.u32 [#allocation8], 4
      %s66 = int_to_ptr.vmem [resolvable:$true] %s65
      %71 = dma.hbm_to_vmem [thread:$0]  %s64, 1024, %s66, [#allocation9], 64, 64, 4
    $region25: #{tpu_custom_call.1} parent=1 // pred_fallthru
      _
    // Predicated region
    $region26: #{tpu_custom_call.1} parent=1 // pred_check
      _
    $region27: #{tpu_custom_call.1} parent=1 // pred_check_branch
      %73 = sbr.rel (0) target = $region29
    $region28: #{tpu_custom_call.1} parent=1 // pred_region
      %75 = vsyncadd [#allocation9], 0
      %s76 = sshll.u32 %s6, 4
      %s77 = int_to_ptr.hbm [resolvable:$true] %s76
      %s78 = sshll.u32 [#allocation10], 4
      %s79 = int_to_ptr.vmem [resolvable:$true] %s78
      %84 = dma.hbm_to_vmem [thread:$0]  %s77, 256, %s79, [#allocation9], 128, 128, 8
    $region29: #{tpu_custom_call.1} parent=1 // pred_fallthru
      _
    // Predicated region
    $region30: #{tpu_custom_call.1} parent=1 // pred_check
      _
    $region31: #{tpu_custom_call.1} parent=1 // pred_check_branch
      %86 = sbr.rel (0) target = $region33
    $region32: #{tpu_custom_call.1} parent=1 // pred_region
      %88 = dma.done [#allocation3], 128
    $region33: #{tpu_custom_call.1} parent=1 // pred_fallthru
      _
    // Predicated region
    $region34: #{tpu_custom_call.1} parent=1 // pred_check
      _
    $region35: #{tpu_custom_call.1} parent=1 // pred_check_branch
      %90 = sbr.rel (0) target = $region37
    $region36: #{tpu_custom_call.1} parent=1 // pred_region
      %92 = dma.done [#allocation6], 256
    $region37: #{tpu_custom_call.1} parent=1 // pred_fallthru
      _
    // Predicated region
    $region38: #{tpu_custom_call.1} parent=1 // pred_check
      _
    $region39: #{tpu_custom_call.1} parent=1 // pred_check_branch
      %94 = sbr.rel (0) target = $region41
    $region40: #{tpu_custom_call.1} parent=1 // pred_region
      %96 = dma.done [#allocation6], 256
    $region41: #{tpu_custom_call.1} parent=1 // pred_fallthru
      _
    // Predicated region
    $region42: #{tpu_custom_call.1} parent=1 // pred_check
      _
    $region43: #{tpu_custom_call.1} parent=1 // pred_check_branch
      %98 = sbr.rel (0) target = $region45
    $region44: #{tpu_custom_call.1} parent=1 // pred_region
      %100 = dma.done [#allocation9], 1024
    $region45: #{tpu_custom_call.1} parent=1 // pred_fallthru
      _
    // Predicated region
    $region46: #{tpu_custom_call.1} parent=1 // pred_check
      _
    $region47: #{tpu_custom_call.1} parent=1 // pred_check_branch
      %102 = sbr.rel (0) target = $region49
    $region48: #{tpu_custom_call.1} parent=1 // pred_region
      %104 = dma.done [#allocation9], 256
    $region49: #{tpu_custom_call.1} parent=1 // pred_fallthru
      _
    %v106 = vld [vmem:[#allocation2] sm:$0xf]
    %v107 = vld [vmem:[#allocation2 + $0x4] sm:$0xf]
    %v108 = vld [vmem:[#allocation5] sm:$0xf]
    %v109 = vld [vmem:[#allocation5 + $0x4] sm:$0xf]
    %v110 = vld [vmem:[#allocation5 + $0x8] sm:$0xf]
    %v111 = vld [vmem:[#allocation5 + $0xc] sm:$0xf]
    %v112 = vld [vmem:[%s2] sm:$0x1]
    %v114 = vperm.slane %v112, 0
    %v118 = vunpack.c.l.b16 %v106
    %v119 = vunpack.c.l.b16 %v107
    %v120 = vpack.c.b16 %v119, %v118
    %v125 = vunpack.c.l.b16 %v108
    %v126 = vunpack.c.l.b16 %v109
    %v127 = vunpack.c.l.b16 %v110
    %v128 = vunpack.c.l.b16 %v111
    %v129 = vpack.c.b16 %v126, %v125
    %v130 = vpack.c.b16 %v128, %v127
    %vm131 = vcmask 523264
    %v133 = vsel %vm131, %v120, 0
    %v136 = vsel %vm131, %v129, 0
    %v139 = vsel %vm131, %v130, 0
    %141 = vmatpush.bf16.xpose.msra.mxu0 0
    %142 = vmatpush.bf16.xpose.msra.mxu0 0
    %143 = vmatpush.bf16.xpose.msra.mxu0 0
    %144 = vmatpush.bf16.xpose.msra.mxu0 0
    %145 = vmatpush.bf16.xpose.msra.mxu0 0
    %146 = vmatpush.bf16.xpose.msra.mxu0 0
    %147 = vmatpush.bf16.xpose.msra.mxu0 %v139
    %148 = vmatpush.bf16.xpose.msra.mxu0 %v136
    %149 = vmatmul.bf16.gmra.mxu0 %v133
    %v150 = vpop.f32.mrf.mxu0
    %v151 = vadd.f32 %v114, %v150
    %v152 = vpop.f32.mrf.mxu0
    %v153 = vadd.f32 %v114, %v152
    %154 = vdwg.mxu0
    %v155 = vpack.c.bf16 %v153, %v151
    %v156 = vld [vmem:[#allocation7] sm:$0xf]
    %v157 = vld [vmem:[#allocation7 + $0x4] sm:$0xf]
    %v158 = vld [vmem:[#allocation7 + $0x8] sm:$0xf]
    %v159 = vld [vmem:[#allocation7 + $0xc] sm:$0xf]
    %v164 = vunpack.c.l.b16 %v156
    %v165 = vunpack.c.l.b16 %v157
    %v166 = vunpack.c.l.b16 %v158
    %v167 = vunpack.c.l.b16 %v159
    %v168 = vpack.c.b16 %v165, %v164
    %v169 = vpack.c.b16 %v167, %v166
    %vm172 = vcmask 261120
    %v174 = vsel %vm172, %v155, 0
    %176 = vmatpush.bf16.msra.mxu0 0
    %177 = vmatpush.bf16.msra.mxu0 0
    %178 = vmatpush.bf16.msra.mxu0 0
    %179 = vmatpush.bf16.msra.mxu0 0
    %180 = vmatpush.bf16.msra.mxu0 0
    %181 = vmatpush.bf16.msra.mxu0 0
    %182 = vmatpush.bf16.msra.mxu0 %v169
    %183 = vmatpush.bf16.msra.mxu0 %v168
    %184 = vmatmul.bf16.gmra.mxu0 %v174
    %v185 = vpop.f32.mrf.mxu0
    %v186 = vadd.f32 0.0, %v185
    %v187 = vpop.f32.mrf.mxu0
    %v188 = vadd.f32 0.0, %v187
    %189 = vdwg.mxu0
    %v190 = vld [vmem:[%s4] sm:$0x1]
    %v192 = vperm.slane %v190, 0
    %v194 = vmul.f32 %v151, %v192
    %v195 = vmul.f32 %v153, %v192
    %v196 = vsel %vm172, %v194, 0.0
    %197 = vadd.xlane.f32.xlu0 %v196
    %v198 = vpop.xlane.xlu0 %197
    %v199 = vsel %vm172, %v195, 0.0
    %200 = vadd.xlane.f32.xlu0 %v199
    %v201 = vpop.xlane.xlu0 %200
    %v202 = vld [vmem:[#allocation8] sm:$0xf]
    %v203 = vld [vmem:[#allocation8 + $0x4] sm:$0xf]
    %v204 = vld [vmem:[#allocation8 + $0x8] sm:$0xf]
    %v205 = vld [vmem:[#allocation8 + $0xc] sm:$0xf]
    %v206 = vld [vmem:[#allocation8 + $0x10] sm:$0xf]
    %v207 = vld [vmem:[#allocation8 + $0x14] sm:$0xf]
    %v208 = vld [vmem:[#allocation8 + $0x18] sm:$0xf]
    %v209 = vld [vmem:[#allocation8 + $0x1c] sm:$0xf]
    %v210 = vld [vmem:[#allocation8 + $0x20] sm:$0xf]
    %v211 = vld [vmem:[#allocation8 + $0x24] sm:$0xf]
    %v212 = vld [vmem:[#allocation8 + $0x28] sm:$0xf]
    %v213 = vld [vmem:[#allocation8 + $0x2c] sm:$0xf]
    %v214 = vld [vmem:[#allocation8 + $0x30] sm:$0xf]
    %v215 = vld [vmem:[#allocation8 + $0x34] sm:$0xf]
    %v216 = vld [vmem:[#allocation8 + $0x38] sm:$0xf]
    %v217 = vld [vmem:[#allocation8 + $0x3c] sm:$0xf]
    %v218 = vpack.c.bf16 %v186, %v186
    %v219 = vpack.c.bf16 %v188, %v188
    %v222 = vrot.slane %v218, 3
    %v223 = vrot.slane %v219, 3
    %vm224 = vcmask 1040384
    %v227 = vsel %vm224, %v218, %v222
    %vm229 = vcmask 1041409
    %v230 = vsel %vm229, %v218, %v222
    %v232 = vrot.slane %v230, 1
    %vm233 = vcmask 1042434
    %v234 = vsel %vm233, %v218, %v222
    %v236 = vrot.slane %v234, 2
    %vm237 = vcmask 1043459
    %v238 = vsel %vm237, %v218, %v222
    %v240 = vrot.slane %v238, 3
    %v243 = vsel %vm224, %v219, %v223
    %v245 = vsel %vm229, %v219, %v223
    %v247 = vrot.slane %v245, 1
    %v248 = vsel %vm233, %v219, %v223
    %v250 = vrot.slane %v248, 2
    %v251 = vsel %vm237, %v219, %v223
    %v253 = vrot.slane %v251, 3
    %v254 = vunpack.i.l.s16 %v227
    %v255 = vunpack.i.h.s16 %v227
    %v256 = vunpack.i.l.s16 %v232
    %v257 = vunpack.i.h.s16 %v232
    %v258 = vunpack.i.l.s16 %v236
    %v259 = vunpack.i.h.s16 %v236
    %v260 = vunpack.i.l.s16 %v240
    %v261 = vunpack.i.h.s16 %v240
    %v262 = vunpack.i.l.s16 %v243
    %v263 = vunpack.i.h.s16 %v243
    %v264 = vunpack.i.l.s16 %v247
    %v265 = vunpack.i.h.s16 %v247
    %v266 = vunpack.i.l.s16 %v250
    %v267 = vunpack.i.h.s16 %v250
    %v268 = vunpack.i.l.s16 %v253
    %v269 = vunpack.i.h.s16 %v253
    %v270 = vpack.i.b16 %v254, %v254
    %v271 = vpack.i.b16 %v255, %v255
    %v272 = vpack.i.b16 %v256, %v256
    %v273 = vpack.i.b16 %v257, %v257
    %v274 = vpack.i.b16 %v258, %v258
    %v275 = vpack.i.b16 %v259, %v259
    %v276 = vpack.i.b16 %v260, %v260
    %v277 = vpack.i.b16 %v261, %v261
    %v278 = vpack.i.b16 %v262, %v262
    %v279 = vpack.i.b16 %v263, %v263
    %v280 = vpack.i.b16 %v264, %v264
    %v281 = vpack.i.b16 %v265, %v265
    %v282 = vpack.i.b16 %v266, %v266
    %v283 = vpack.i.b16 %v267, %v267
    %v284 = vpack.i.b16 %v268, %v268
    %v285 = vpack.i.b16 %v269, %v269
    %v286 = vperm.slane %v270, 0
    %v287 = vperm.slane %v271, 0
    %v288 = vperm.slane %v272, 0
    %v289 = vperm.slane %v273, 0
    %v290 = vperm.slane %v274, 0
    %v291 = vperm.slane %v275, 0
    %v292 = vperm.slane %v276, 0
    %v293 = vperm.slane %v277, 0
    %v294 = vperm.slane %v278, 0
    %v295 = vperm.slane %v279, 0
    %v296 = vperm.slane %v280, 0
    %v297 = vperm.slane %v281, 0
    %v298 = vperm.slane %v282, 0
    %v299 = vperm.slane %v283, 0
    %v300 = vperm.slane %v284, 0
    %v301 = vperm.slane %v285, 0
    %v303 = vpack.i.b16 %v286, %v286
    %v305 = vperm.slane %v303, 0
    %v307 = vpack.i.b16 %v287, %v287
    %v309 = vperm.slane %v307, 0
    %v311 = vpack.i.b16 %v288, %v288
    %v313 = vperm.slane %v311, 0
    %v315 = vpack.i.b16 %v289, %v289
    %v317 = vperm.slane %v315, 0
    %v319 = vpack.i.b16 %v290, %v290
    %v321 = vperm.slane %v319, 0
    %v323 = vpack.i.b16 %v291, %v291
    %v325 = vperm.slane %v323, 0
    %v327 = vpack.i.b16 %v292, %v292
    %v329 = vperm.slane %v327, 0
    %v331 = vpack.i.b16 %v293, %v293
    %v333 = vperm.slane %v331, 0
    %v335 = vpack.i.b16 %v294, %v294
    %v337 = vperm.slane %v335, 0
    %v339 = vpack.i.b16 %v295, %v295
    %v341 = vperm.slane %v339, 0
    %v343 = vpack.i.b16 %v296, %v296
    %v345 = vperm.slane %v343, 0
    %v347 = vpack.i.b16 %v297, %v297
    %v349 = vperm.slane %v347, 0
    %v351 = vpack.i.b16 %v298, %v298
    %v353 = vperm.slane %v351, 0
    %v355 = vpack.i.b16 %v299, %v299
    %v357 = vperm.slane %v355, 0
    %v359 = vpack.i.b16 %v300, %v300
    %v361 = vperm.slane %v359, 0
    %v363 = vpack.i.b16 %v301, %v301
    %v365 = vperm.slane %v363, 0
    %v366 = vunpack.c.l.bf16 %v202
    %v367 = vunpack.c.l.bf16 %v203
    %v368 = vunpack.c.l.bf16 %v204
    %v369 = vunpack.c.l.bf16 %v205
    %v370 = vunpack.c.l.bf16 %v206
    %v371 = vunpack.c.l.bf16 %v207
    %v372 = vunpack.c.l.bf16 %v208
    %v373 = vunpack.c.l.bf16 %v209
    %v374 = vunpack.c.l.bf16 %v210
    %v375 = vunpack.c.l.bf16 %v211
    %v376 = vunpack.c.l.bf16 %v212
    %v377 = vunpack.c.l.bf16 %v213
    %v378 = vunpack.c.l.bf16 %v214
    %v379 = vunpack.c.l.bf16 %v215
    %v380 = vunpack.c.l.bf16 %v216
    %v381 = vunpack.c.l.bf16 %v217
    %v382 = vunpack.c.l.bf16 %v305
    %v383 = vunpack.c.l.bf16 %v309
    %v384 = vunpack.c.l.bf16 %v313
    %v385 = vunpack.c.l.bf16 %v317
    %v386 = vunpack.c.l.bf16 %v321
    %v387 = vunpack.c.l.bf16 %v325
    %v388 = vunpack.c.l.bf16 %v329
    %v389 = vunpack.c.l.bf16 %v333
    %v390 = vunpack.c.l.bf16 %v337
    %v391 = vunpack.c.l.bf16 %v341
    %v392 = vunpack.c.l.bf16 %v345
    %v393 = vunpack.c.l.bf16 %v349
    %v394 = vunpack.c.l.bf16 %v353
    %v395 = vunpack.c.l.bf16 %v357
    %v396 = vunpack.c.l.bf16 %v361
    %v397 = vunpack.c.l.bf16 %v365
    %v398 = vmul.f32 %v366, %v382
    %v399 = vmul.f32 %v367, %v383
    %v400 = vmul.f32 %v368, %v384
    %v401 = vmul.f32 %v369, %v385
    %v402 = vmul.f32 %v370, %v386
    %v403 = vmul.f32 %v371, %v387
    %v404 = vmul.f32 %v372, %v388
    %v405 = vmul.f32 %v373, %v389
    %v406 = vmul.f32 %v374, %v390
    %v407 = vmul.f32 %v375, %v391
    %v408 = vmul.f32 %v376, %v392
    %v409 = vmul.f32 %v377, %v393
    %v410 = vmul.f32 %v378, %v394
    %v411 = vmul.f32 %v379, %v395
    %v412 = vmul.f32 %v380, %v396
    %v413 = vmul.f32 %v381, %v397
    %v414 = vpack.c.bf16 %v398, %v398
    %v415 = vpack.c.bf16 %v399, %v399
    %v416 = vpack.c.bf16 %v400, %v400
    %v417 = vpack.c.bf16 %v401, %v401
    %v418 = vpack.c.bf16 %v402, %v402
    %v419 = vpack.c.bf16 %v403, %v403
    %v420 = vpack.c.bf16 %v404, %v404
    %v421 = vpack.c.bf16 %v405, %v405
    %v422 = vpack.c.bf16 %v406, %v406
    %v423 = vpack.c.bf16 %v407, %v407
    %v424 = vpack.c.bf16 %v408, %v408
    %v425 = vpack.c.bf16 %v409, %v409
    %v426 = vpack.c.bf16 %v410, %v410
    %v427 = vpack.c.bf16 %v411, %v411
    %v428 = vpack.c.bf16 %v412, %v412
    %v429 = vpack.c.bf16 %v413, %v413
    %v430 = vunpack.c.l.bf16 %v414
    %v431 = vunpack.c.l.bf16 %v415
    %v432 = vunpack.c.l.bf16 %v416
    %v433 = vunpack.c.l.bf16 %v417
    %v434 = vunpack.c.l.bf16 %v418
    %v435 = vunpack.c.l.bf16 %v419
    %v436 = vunpack.c.l.bf16 %v420
    %v437 = vunpack.c.l.bf16 %v421
    %v438 = vunpack.c.l.bf16 %v422
    %v439 = vunpack.c.l.bf16 %v423
    %v440 = vunpack.c.l.bf16 %v424
    %v441 = vunpack.c.l.bf16 %v425
    %v442 = vunpack.c.l.bf16 %v426
    %v443 = vunpack.c.l.bf16 %v427
    %v444 = vunpack.c.l.bf16 %v428
    %v445 = vunpack.c.l.bf16 %v429
    %v446 = vsel %vm172, %v430, 0.0
    %447 = vadd.xlane.f32.xlu0 %v446
    %v448 = vpop.xlane.xlu0 %447
    %v449 = vsel %vm172, %v431, 0.0
    %450 = vadd.xlane.f32.xlu0 %v449
    %v451 = vpop.xlane.xlu0 %450
    %v452 = vsel %vm172, %v432, 0.0
    %453 = vadd.xlane.f32.xlu0 %v452
    %v454 = vpop.xlane.xlu0 %453
    %v455 = vsel %vm172, %v433, 0.0
    %456 = vadd.xlane.f32.xlu0 %v455
    %v457 = vpop.xlane.xlu0 %456
    %v458 = vsel %vm172, %v434, 0.0
    %459 = vadd.xlane.f32.xlu0 %v458
    %v460 = vpop.xlane.xlu0 %459
    %v461 = vsel %vm172, %v435, 0.0
    %462 = vadd.xlane.f32.xlu0 %v461
    %v463 = vpop.xlane.xlu0 %462
    %v464 = vsel %vm172, %v436, 0.0
    %465 = vadd.xlane.f32.xlu0 %v464
    %v466 = vpop.xlane.xlu0 %465
    %v467 = vsel %vm172, %v437, 0.0
    %468 = vadd.xlane.f32.xlu0 %v467
    %v469 = vpop.xlane.xlu0 %468
    %v470 = vsel %vm172, %v438, 0.0
    %471 = vadd.xlane.f32.xlu0 %v470
    %v472 = vpop.xlane.xlu0 %471
    %v473 = vsel %vm172, %v439, 0.0
    %474 = vadd.xlane.f32.xlu0 %v473
    %v475 = vpop.xlane.xlu0 %474
    %v476 = vsel %vm172, %v440, 0.0
    %477 = vadd.xlane.f32.xlu0 %v476
    %v478 = vpop.xlane.xlu0 %477
    %v479 = vsel %vm172, %v441, 0.0
    %480 = vadd.xlane.f32.xlu0 %v479
    %v481 = vpop.xlane.xlu0 %480
    %v482 = vsel %vm172, %v442, 0.0
    %483 = vadd.xlane.f32.xlu0 %v482
    %v484 = vpop.xlane.xlu0 %483
    %v485 = vsel %vm172, %v443, 0.0
    %486 = vadd.xlane.f32.xlu0 %v485
    %v487 = vpop.xlane.xlu0 %486
    %v488 = vsel %vm172, %v444, 0.0
    %489 = vadd.xlane.f32.xlu0 %v488
    %v490 = vpop.xlane.xlu0 %489
    %v491 = vsel %vm172, %v445, 0.0
    %492 = vadd.xlane.f32.xlu0 %v491
    %v493 = vpop.xlane.xlu0 %492
    %v496 = vperm.slane %v198, 0
    %v497 = vperm.slane %v198, 1
    %v498 = vperm.slane %v198, 2
    %v499 = vperm.slane %v198, 3
    %v500 = vperm.slane %v198, 4
    %v501 = vperm.slane %v198, 5
    %v502 = vperm.slane %v198, 6
    %v503 = vperm.slane %v198, 7
    %v504 = vperm.slane %v201, 0
    %v505 = vperm.slane %v201, 1
    %v506 = vperm.slane %v201, 2
    %v507 = vperm.slane %v201, 3
    %v508 = vperm.slane %v201, 4
    %v509 = vperm.slane %v201, 5
    %v510 = vperm.slane %v201, 6
    %v511 = vperm.slane %v201, 7
    %v528 = vadd.f32 %v448, %v496
    %v529 = vadd.f32 %v451, %v497
    %v530 = vadd.f32 %v454, %v498
    %v531 = vadd.f32 %v457, %v499
    %v532 = vadd.f32 %v460, %v500
    %v533 = vadd.f32 %v463, %v501
    %v534 = vadd.f32 %v466, %v502
    %v535 = vadd.f32 %v469, %v503
    %v536 = vadd.f32 %v472, %v504
    %v537 = vadd.f32 %v475, %v505
    %v538 = vadd.f32 %v478, %v506
    %v539 = vadd.f32 %v481, %v507
    %v540 = vadd.f32 %v484, %v508
    %v541 = vadd.f32 %v487, %v509
    %v542 = vadd.f32 %v490, %v510
    %v543 = vadd.f32 %v493, %v511
    %v544 = vlaneseq
    %v545 = vshrl.u32 %v544, 7
    %v546 = vlaneseq
    %v547 = vand.u32 %v546, 127
    %vm548 = vcmp.eq.s32.totalorder %v545, %v547
    %v549 = vsel %vm548, 1, 0
    %v550 = vcvt.s32.f32 %v549
    %567 = vset.pattern.permute.xlu0 0
    %568 = vperm.xlu0 %567, %v528
    %v569 = vpop.permute.xlu0 %568
    %570 = vset.pattern.permute.xlu0 0
    %571 = vperm.xlu0 %570, %v529
    %v572 = vpop.permute.xlu0 %571
    %573 = vset.pattern.permute.xlu0 0
    %574 = vperm.xlu0 %573, %v530
    %v575 = vpop.permute.xlu0 %574
    %576 = vset.pattern.permute.xlu0 0
    %577 = vperm.xlu0 %576, %v531
    %v578 = vpop.permute.xlu0 %577
    %579 = vset.pattern.permute.xlu0 0
    %580 = vperm.xlu0 %579, %v532
    %v581 = vpop.permute.xlu0 %580
    %582 = vset.pattern.permute.xlu0 0
    %583 = vperm.xlu0 %582, %v533
    %v584 = vpop.permute.xlu0 %583
    %585 = vset.pattern.permute.xlu0 0
    %586 = vperm.xlu0 %585, %v534
    %v587 = vpop.permute.xlu0 %586
    %588 = vset.pattern.permute.xlu0 0
    %589 = vperm.xlu0 %588, %v535
    %v590 = vpop.permute.xlu0 %589
    %591 = vset.pattern.permute.xlu0 0
    %592 = vperm.xlu0 %591, %v536
    %v593 = vpop.permute.xlu0 %592
    %594 = vset.pattern.permute.xlu0 0
    %595 = vperm.xlu0 %594, %v537
    %v596 = vpop.permute.xlu0 %595
    %597 = vset.pattern.permute.xlu0 0
    %598 = vperm.xlu0 %597, %v538
    %v599 = vpop.permute.xlu0 %598
    %600 = vset.pattern.permute.xlu0 0
    %601 = vperm.xlu0 %600, %v539
    %v602 = vpop.permute.xlu0 %601
    %603 = vset.pattern.permute.xlu0 0
    %604 = vperm.xlu0 %603, %v540
    %v605 = vpop.permute.xlu0 %604
    %606 = vset.pattern.permute.xlu0 0
    %607 = vperm.xlu0 %606, %v541
    %v608 = vpop.permute.xlu0 %607
    %609 = vset.pattern.permute.xlu0 0
    %610 = vperm.xlu0 %609, %v542
    %v611 = vpop.permute.xlu0 %610
    %612 = vset.pattern.permute.xlu0 0
    %613 = vperm.xlu0 %612, %v543
    %v614 = vpop.permute.xlu0 %613
    %v615 = vperm.slane %v569, %v547
    %v616 = vperm.slane %v572, %v547
    %v617 = vperm.slane %v575, %v547
    %v618 = vperm.slane %v578, %v547
    %v619 = vperm.slane %v581, %v547
    %v620 = vperm.slane %v584, %v547
    %v621 = vperm.slane %v587, %v547
    %v622 = vperm.slane %v590, %v547
    %v623 = vperm.slane %v593, %v547
    %v624 = vperm.slane %v596, %v547
    %v625 = vperm.slane %v599, %v547
    %v626 = vperm.slane %v602, %v547
    %v627 = vperm.slane %v605, %v547
    %v628 = vperm.slane %v608, %v547
    %v629 = vperm.slane %v611, %v547
    %v630 = vperm.slane %v614, %v547
    %v631 = vsel %vm229, %v616, %v615
    %v632 = vsel %vm233, %v617, %v631
    %v633 = vsel %vm237, %v618, %v632
    %vm634 = vcmask 1044484
    %v635 = vsel %vm634, %v619, %v633
    %vm636 = vcmask 1045509
    %v637 = vsel %vm636, %v620, %v635
    %vm638 = vcmask 1046534
    %v639 = vsel %vm638, %v621, %v637
    %vm640 = vcmask 1047559
    %v641 = vsel %vm640, %v622, %v639
    %v642 = vsel %vm229, %v624, %v623
    %v643 = vsel %vm233, %v625, %v642
    %v644 = vsel %vm237, %v626, %v643
    %v645 = vsel %vm634, %v627, %v644
    %v646 = vsel %vm636, %v628, %v645
    %v647 = vsel %vm638, %v629, %v646
    %v648 = vsel %vm640, %v630, %v647
    %vm649 = vcmask 64512
    %v650 = vsel %vm649, %v641, 0
    %v652 = vsel %vm649, %v648, 0
    %654 = vmatpush.msra.mxu0 0.0
    %655 = vmatpush.msra.mxu0 0.0
    %656 = vmatpush.msra.mxu0 0.0
    %657 = vmatpush.msra.mxu0 0.0
    %658 = vmatpush.msra.mxu0 0.0
    %659 = vmatpush.msra.mxu0 0.0
    %660 = vmatpush.msra.mxu0 0.0
    %661 = vmatpush.msra.mxu0 0.0
    %662 = vmatpush.msra.mxu0 0.0
    %663 = vmatpush.msra.mxu0 0.0
    %664 = vmatpush.msra.mxu0 0.0
    %665 = vmatpush.msra.mxu0 0.0
    %666 = vmatpush.msra.mxu0 0.0
    %667 = vmatpush.msra.mxu0 0.0
    %668 = vmatpush.msra.mxu0 0.0
    %669 = vmatpush.msra.mxu0 %v550
    %670 = vmatmul.f32.gmra.mxu0 %v650
    %v671 = vpop.f32.mrf.mxu0
    %v672 = vadd.f32 0.0, %v671
    %673 = vmatmul.f32.gmra.mxu0 %v652
    %v674 = vpop.f32.mrf.mxu0
    %v675 = vadd.f32 0.0, %v674
    %676 = vdwg.mxu0
    %v677 = vld [vmem:[#allocation10] sm:$0xff]
    %v678 = vld [vmem:[#allocation10 + $0x8] sm:$0xff]
    %vm679 = vcmp.ne.s32.totalorder %v677, 0
    %vm680 = vcmp.ne.s32.totalorder %v678, 0
    %v681 = vsel %vm679, %v672, -1e+20
    %v682 = vsel %vm680, %v675, -1e+20
    %683 = vst [vmem:[#allocation11] sm:$0xff] %v681
    %684 = vst [vmem:[#allocation11 + $0x8] sm:$0xff] %v682
    // Predicated region
    $region50: #{tpu_custom_call.1} parent=1 // pred_check
      _
    $region51: #{tpu_custom_call.1} parent=1 // pred_check_branch
      %686 = sbr.rel (0) target = $region53
    $region52: #{tpu_custom_call.1} parent=1 // pred_region
      %688 = vsyncadd [#allocation4], 0
      %s689 = sshll.u32 [#allocation11], 4
      %s690 = int_to_ptr.vmem [resolvable:$true] %s689
      %s691 = sshll.u32 %s7, 4
      %s692 = int_to_ptr.hbm [resolvable:$true] %s691
      %697 = dma.vmem_to_hbm [thread:$0]  %s690, 256, %s692, [#allocation4], 128, 128, 8
    $region53: #{tpu_custom_call.1} parent=1 // pred_fallthru
      _
    // Predicated region
    $region54: #{tpu_custom_call.1} parent=1 // pred_check
      _
    $region55: #{tpu_custom_call.1} parent=1 // pred_check_branch
      %699 = sbr.rel (0) target = $region57
    $region56: #{tpu_custom_call.1} parent=1 // pred_region
      %701 = dma.done [#allocation4], 256
    $region57: #{tpu_custom_call.1} parent=1 // pred_fallthru
      _
    %702 = vsyncpa [#allocation3], 1
    %703 = vsyncpa [#allocation6], 1
    %704 = vsyncpa [#allocation9], 1
    %705 = vsyncpa [#allocation4], 1

</llo_original>
